<compile_context>
chip_gen: v7x
topology: tpu7x:2x2x1
jax: 0.10.0
libtpu: 0.0.40
codegen_flags: <defaults>
</compile_context>

<pallas_src>
import jax
import jax.numpy as jnp
from jax.experimental import pallas as pl
from jax.experimental.pallas import tpu as pltpu

_LANE = 128


def _scale_kernel(x_ref, w_ref, o_ref):
    # x_ref/o_ref: (rb, cb) tile; w_ref: (rb, 1) column (layout A) or (1, cb) row (layout B).
    # Plain VPU broadcast-multiply; any dtype promotion happens in-register.
    o_ref[...] = (x_ref[...] * w_ref[...]).astype(o_ref.dtype)


def _chip_kind():
    try:
        kind = jax.devices()[0].device_kind.lower()
    except Exception:
        return "unknown"
    if "v7" in kind:
        return "v7x"
    if "v6" in kind:
        return "v6e"
    if "v5" in kind and ("lite" in kind or "v5e" in kind):
        return "v5e"
    return "unknown"


# chip -> (target bytes per x tile, VMEM budget for double-buffered x+out tiles, has 2 TCs)
_CHIP_TABLE = {
    "v7x": (6 * 1024 * 1024, 24 * 1024 * 1024, True),    # 32 MiB scoped default, 64 MiB phys
    "v6e": (4 * 1024 * 1024, 24 * 1024 * 1024, False),   # 32 MiB scoped default
    "v5e": (2 * 1024 * 1024, 12 * 1024 * 1024, False),   # 16 MiB scoped default
    "unknown": (2 * 1024 * 1024, 12 * 1024 * 1024, False),
}


def _sublane(itemsize):
    # Native sublane tile: f32 -> 8, bf16 -> 16, int8/fp8 -> 32.
    return 8 * max(1, 4 // max(1, itemsize))


def _round_up(v, m):
    return ((v + m - 1) // m) * m


def _cdiv(a, b):
    return -(-a // b)


def _pick_blocks(rows, cols, x_item, out_item, *, target_bytes, vmem_budget, two_cores):
    """Choose an (rb, cb) block for a (rows, cols) lane-dense elementwise pass.

    Blocks stay (8,128)-legal: rb is a multiple of the native sublane tile (or == rows),
    cb is a multiple of 128 (or == cols)."""
    sub = _sublane(min(x_item, out_item))
    per_elem = 2 * (x_item + out_item)          # double-buffered input + output bytes/element

    # Genuinely tiny: one full-extent step; splitting would only add per-step overhead.
    if rows * cols * x_item <= 256 * 1024:
        return rows, cols

    # Lane (last-dim) block: keep full width unless even a minimal-height tile would exceed
    # the VMEM budget (huge H*W planes) -- then split the lane axis too.
    cb = cols
    if sub * cb * per_elem > vmem_budget:
        cb = max(_LANE, ((vmem_budget // (sub * per_elem)) // _LANE) * _LANE)
        cb = min(cb, cols)

    # Row block: ~target_bytes per x tile, capped by the VMEM budget.
    if rows <= sub:
        rb = rows
    else:
        rb = max(sub, ((target_bytes // (cb * x_item)) // sub) * sub)
        rb_cap = max(sub, ((vmem_budget // (cb * per_elem)) // sub) * sub)
        rb = min(rb, rb_cap, rows)
        if two_cores:
            # v7x: "parallel" only shards across the 2 TensorCores if there are >= 2 steps;
            # prefer an even step count (best effort under sublane-tile rounding).
            nsteps = _cdiv(rows, rb)
            want = 2 if nsteps == 1 else nsteps + (nsteps % 2)
            rb = min(rb, max(sub, _round_up(_cdiv(rows, want), sub)))

    # If the row axis could not be split (rows <= sub), split lanes for the second core.
    if two_cores and _cdiv(rows, rb) * _cdiv(cols, cb) == 1 and cols >= 2 * _LANE:
        cb = _round_up(_cdiv(cols, 2), _LANE)

    return rb, cb


def scale_module_forward(x, weight):
    """x: (N, C, H, W); weight: anything broadcastable to (1, C, 1, 1) (WTConv uses [1,C,1,1])."""
    N, C, H, W = x.shape
    L = H * W
    out_dtype = jnp.result_type(x.dtype, jnp.asarray(weight).dtype)  # match torch.mul promotion
    # TODO(synk): weights with non-singleton spatial dims (unused by WTConv) are not handled.
    w_c = jnp.broadcast_to(jnp.asarray(weight, dtype=out_dtype), (1, C, 1, 1)).reshape(C)

    chip = _chip_kind()
    target_bytes, vmem_budget, two_cores = _CHIP_TABLE.get(chip, _CHIP_TABLE["unknown"])
    x_item = jnp.dtype(x.dtype).itemsize
    out_item = jnp.dtype(out_dtype).itemsize

    # Layout choice: A keeps per-(n,c) rows with the spatial plane on the lane axis
    # (lane util ~ min(L,128)/128); B folds channels+spatial into the lane axis with N on
    # sublanes (sublane util ~ min(N,8)/8) at the cost of an expanded (1, C*H*W) weight row.
    # Pick B only when it is a strict layout win (small 7x7-style planes with enough batch).
    row_layout = (L >= _LANE) or (16 * min(N, 8) <= min(L, _LANE))
    if row_layout:
        rows, cols = N * C, L
        x2 = x.reshape(rows, cols)
        w2 = jnp.broadcast_to(w_c[None, :], (N, C)).reshape(rows, 1)   # (rows, 1) column
    else:
        rows, cols = N, C * L
        x2 = x.reshape(rows, cols)
        w2 = jnp.repeat(w_c, L)[None, :]                               # (1, C*H*W) row

    rb, cb = _pick_blocks(rows, cols, x_item, out_item,
                          target_bytes=target_bytes, vmem_budget=vmem_budget,
                          two_cores=two_cores)
    grid = (pl.cdiv(rows, rb), pl.cdiv(cols, cb))

    if row_layout:
        w_spec = pl.BlockSpec((rb, 1), lambda i, j: (i, 0))
    else:
        w_spec = pl.BlockSpec((1, cb), lambda i, j: (0, j))

    out2 = pl.pallas_call(
        _scale_kernel,
        out_shape=jax.ShapeDtypeStruct((rows, cols), out_dtype),
        grid=grid,
        in_specs=[pl.BlockSpec((rb, cb), lambda i, j: (i, j)), w_spec],
        out_specs=pl.BlockSpec((rb, cb), lambda i, j: (i, j)),
        compiler_params=pltpu.CompilerParams(
            dimension_semantics=("parallel", "parallel"),
        ),
    )(x2, w2)
    return out2.reshape(N, C, H, W)


def make_scale_params(dims, init_scale=1.0, dtype=jnp.float32):
    """Matches nn.Parameter(torch.ones(*dims) * init_scale)."""
    return jnp.ones(dims, dtype=dtype) * init_scale


if __name__ == "__main__":
    key = jax.random.PRNGKey(0)
    k0, k1 = jax.random.split(key)

    # Primary check: the documented WTConv usage (NCHW, per-channel [1,C,1,1] scale).
    N, C, H, W = 2, 4, 16, 16
    init_scale = 0.5  # non-identity so the check exercises the multiply
    x = jax.random.normal(k0, (N, C, H, W), dtype=jnp.float32)
    weight = make_scale_params((1, C, 1, 1), init_scale)
    out = jax.block_until_ready(scale_module_forward(x, weight))
    ref = weight * x
    assert out.shape == ref.shape and out.dtype == ref.dtype
    assert jnp.allclose(out, ref, atol=1e-6, rtol=1e-6)

    # Small-spatial path (layout B): WTConv's deepest 7x7 planes.
    N2, C2, H2, W2 = 4, 8, 7, 7
    x_s = jax.random.normal(k1, (N2, C2, H2, W2), dtype=jnp.float32)
    w_s = make_scale_params((1, C2, 1, 1), 1.5)
    out_s = jax.block_until_ready(scale_module_forward(x_s, w_s))
    assert jnp.allclose(out_s, w_s * x_s, atol=1e-6, rtol=1e-6)

    # Mixed-dtype promotion follows torch.mul (bf16 x * f32 weight -> f32).
    x_bf = x.astype(jnp.bfloat16)
    out_bf = jax.block_until_ready(scale_module_forward(x_bf, weight))
    ref_bf = weight * x_bf
    assert out_bf.dtype == ref_bf.dtype
    assert jnp.allclose(out_bf, ref_bf, atol=1e-2, rtol=1e-2)

    print("KERNEL_OK")
</pallas_src>

<mosaic_0001>
module attributes {stable_mosaic.version = 11 : i64} {
  func.func @_scale_kernel(%arg0: i32, %arg1: i32, %arg2: memref<8x256xf32, #tpu.memory_space<vmem>>, %arg3: memref<8x1xf32, #tpu.memory_space<vmem>>, %arg4: memref<8x256xf32, #tpu.memory_space<vmem>>) attributes {dimension_semantics = [#tpu.dimension_semantics<parallel>, #tpu.dimension_semantics<parallel>], iteration_bounds = array<i64: 1, 1>, scalar_prefetch = 0 : i64, scratch_operands = 0 : i64, tpu.core_type = #tpu.core_type<tc>, window_params = [{transform_indices = @transform_0, window_bounds = array<i64: 8, 256>}, {transform_indices = @transform_1, window_bounds = array<i64: 8, 1>}, {transform_indices = @transform_2, window_bounds = array<i64: 8, 256>}]} {
    %c0 = arith.constant 0 : index
    %c0_0 = arith.constant 0 : index
    %0 = vector.load %arg2[%c0, %c0_0] : memref<8x256xf32, #tpu.memory_space<vmem>>, vector<8x256xf32>
    %c0_1 = arith.constant 0 : index
    %c0_2 = arith.constant 0 : index
    %1 = vector.load %arg3[%c0_1, %c0_2] : memref<8x1xf32, #tpu.memory_space<vmem>>, vector<8x1xf32>
    %2 = vector.broadcast %1 : vector<8x1xf32> to vector<8x256xf32>
    %3 = arith.mulf %0, %2 : vector<8x256xf32>
    %c0_3 = arith.constant 0 : index
    %c0_4 = arith.constant 0 : index
    %4 = vector.load %arg4[%c0_3, %c0_4] : memref<8x256xf32, #tpu.memory_space<vmem>>, vector<8x256xf32>
    tpu.vector_store %arg4[%c0_3, %c0_4], %3 {strides = array<i32>} : memref<8x256xf32, #tpu.memory_space<vmem>>, vector<8x256xf32>,
    return
  }
  func.func @transform_0(%arg0: i32, %arg1: i32) -> (i32, i32) {
    %c0_i32 = arith.constant 0 : i32
    return %arg0, %arg1 : i32, i32
  }
  func.func @transform_1(%arg0: i32, %arg1: i32) -> (i32, i32) {
    %c0_i32 = arith.constant 0 : i32
    %c0_i32_0 = arith.constant 0 : i32
    return %arg0, %c0_i32 : i32, i32
  }
  func.func @transform_2(%arg0: i32, %arg1: i32) -> (i32, i32) {
    %c0_i32 = arith.constant 0 : i32
    return %arg0, %arg1 : i32, i32
  }
}

</mosaic_0001>

<llo_original>
// kernel: tpu_custom_call.1
$region0: #{tpu_custom_call.1}
  #allocation0 [shape = 'u32[]', space=smem, size = 0x4, offset = 0x4, fixed_abs, tag = 'smem constant byte address 0x4 - core index']
  #allocation1 [shape = 'u32[144,128]{1,0:T(1,128)}', space=vmem, size = 0x12000, scoped, tag = 'internal scratch']
  %s0 = inlined_call_operand.hbm [shape: f32[8,256], index: 0, kind: input, shape index: {}]
  %s1 = inlined_call_operand.vmem [shape: f32[8,1], index: 1, kind: input, shape index: {}]
  %s2 = inlined_call_operand.hbm [shape: f32[8,256], index: 2, kind: output, shape index: {}]
  %s3 = sld [smem:[#allocation0]]
  $region22: #{tpu_custom_call.1} parent=0
    _
  %s5 = ssub.s32 1, %s3
  %s6 = scalar_select 0, %s5, %s3
  $region1: #{tpu_custom_call.1} parent=0
    #allocation2 [shape = 'u8[8192]{0}', space=vmem, size = 0x2000, scoped, tag = 'input window, operand 0, single buffered']
    #allocation3 [shape = 's32[1]{0}', space=sflag, size = 0x4, scoped, tag = 'scoped memory for tpu_custom_call.1']
    #allocation4 [shape = 's32[1]{0}', space=sflag, size = 0x4, scoped, tag = 'scoped memory for tpu_custom_call.1']
    #allocation5 [shape = 'u8[8192]{0}', space=vmem, size = 0x2000, scoped, tag = 'output window, operand 0, single buffered']
    %7 = vsyncpa [#allocation3], 0
    %8 = vsyncpa [#allocation4], 0
    // Predicated region
    $region2: #{tpu_custom_call.1} parent=1 // pred_check
      _
    $region3: #{tpu_custom_call.1} parent=1 // pred_check_branch
      %10 = sbr.rel (0) target = $region5
    $region4: #{tpu_custom_call.1} parent=1 // pred_region
      %s12 = ssub.s32 256, 256
      %13 = vsyncadd [#allocation3], %s12
      %s15 = sshll.u32 [#allocation2], 4
      %s16 = int_to_ptr.vmem [resolvable:$true] %s15
      %18 = dma.hbm_to_vmem [thread:$0]  %s0, 256, %s16, [#allocation3]
    $region5: #{tpu_custom_call.1} parent=1 // pred_fallthru
      _
    // Predicated region
    $region6: #{tpu_custom_call.1} parent=1 // pred_check
      _
    $region7: #{tpu_custom_call.1} parent=1 // pred_check_branch
      %20 = sbr.rel (0) target = $region9
    $region8: #{tpu_custom_call.1} parent=1 // pred_region
      _
    $region9: #{tpu_custom_call.1} parent=1 // pred_fallthru
      _
    // Predicated region
    $region10: #{tpu_custom_call.1} parent=1 // pred_check
      _
    $region11: #{tpu_custom_call.1} parent=1 // pred_check_branch
      %22 = sbr.rel (0) target = $region13
    $region12: #{tpu_custom_call.1} parent=1 // pred_region
      %23 = dma.done [#allocation3], 256
    $region13: #{tpu_custom_call.1} parent=1 // pred_fallthru
      _
    %v24 = vld [vmem:[#allocation2] sm:$0xff]
    %v25 = vld [vmem:[#allocation2 + $0x8] sm:$0xff]
    %v26 = vld [vmem:[%s1] sm:$0xff]
    %28 = vset.pattern.permute.xlu0 0
    %29 = vperm.xlu0 %28, %v26
    %v30 = vpop.permute.xlu0 %29
    %v32 = vmul.f32 %v24, %v30
    %v33 = vmul.f32 %v25, %v30
    %34 = vst [vmem:[#allocation5] sm:$0xff] %v32
    %35 = vst [vmem:[#allocation5 + $0x8] sm:$0xff] %v33
    // Predicated region
    $region14: #{tpu_custom_call.1} parent=1 // pred_check
      _
    $region15: #{tpu_custom_call.1} parent=1 // pred_check_branch
      %37 = sbr.rel (0) target = $region17
    $region16: #{tpu_custom_call.1} parent=1 // pred_region
      %s39 = ssub.s32 256, 256
      %40 = vsyncadd [#allocation4], %s39
      %s42 = sshll.u32 [#allocation5], 4
      %s43 = int_to_ptr.vmem [resolvable:$true] %s42
      %45 = dma.vmem_to_hbm [thread:$0]  %s43, 256, %s2, [#allocation4]
    $region17: #{tpu_custom_call.1} parent=1 // pred_fallthru
      _
    // Predicated region
    $region18: #{tpu_custom_call.1} parent=1 // pred_check
      _
    $region19: #{tpu_custom_call.1} parent=1 // pred_check_branch
      %47 = sbr.rel (0) target = $region21
    $region20: #{tpu_custom_call.1} parent=1 // pred_region
      %48 = dma.done [#allocation4], 256
    $region21: #{tpu_custom_call.1} parent=1 // pred_fallthru
      _
    %49 = vsyncpa [#allocation3], 1
    %50 = vsyncpa [#allocation4], 1

</llo_original>
